<compile_context>
chip_gen: v6e
topology: v6e:2x2x1
jax: 0.10.0
libtpu: 0.0.40
codegen_flags: <defaults>
</compile_context>

<pallas_src>
import math

import jax
import jax.numpy as jnp
from jax.experimental import pallas as pl
from jax.experimental.pallas import tpu as pltpu

D = 32  # the PyTorch global `D` referenced by the module


def make_pos_encoding(d: int, length: int, dtype=jnp.float32) -> jnp.ndarray:
    """Replicates PosEncoder.__init__ exactly (incl. the `-10000 ** x` precedence quirk)."""
    i = jnp.arange(d, dtype=jnp.float32)
    even_freq = 10000.0 ** (-i / d)             # i even:   10000**(-i/D)
    odd_freq = -(10000.0 ** ((1.0 - i) / d))    # i odd : -(10000**((1-i)/D))
    is_even = (jnp.arange(d) % 2) == 0
    freqs = jnp.where(is_even, even_freq, odd_freq)[:, None]    # (D, 1)
    phases = jnp.where(is_even, 0.0, math.pi / 2.0)[:, None]    # (D, 1)
    pos = jnp.arange(length, dtype=jnp.float32)[None, :]        # (1, L)
    return jnp.sin(pos * freqs + phases).astype(dtype)          # (D, L)


def _round_up(n: int, m: int) -> int:
    return ((n + m - 1) // m) * m


def _sublane(itemsize: int) -> int:
    # dtype-aware sublane packing: f32 -> 8, bf16/f16 -> 16, int8/fp8 -> 32
    return {1: 32, 2: 16}.get(itemsize, 8)


def prepare_pos_encoding(pos_encoding: jnp.ndarray, dtype) -> jnp.ndarray:
    """Cast + flatten + lane-pad the PE buffer ONCE (amortized across calls)."""
    d, length = pos_encoding.shape
    flat = d * length
    flat_pad = _round_up(flat, 128)
    pe_row = pos_encoding.astype(dtype).reshape(1, flat)
    if flat_pad != flat:
        pe_row = jnp.pad(pe_row, ((0, 0), (0, flat_pad - flat)))
    return pe_row  # (1, flat_pad)


def _pos_add_kernel(x_ref, pe_ref, o_ref):
    # Pure VPU elementwise add; the (1, Ct) pe block broadcasts over (Bt, Ct).
    o_ref[...] = x_ref[...] + pe_ref[...]


def _choose_col_block(flat_pad: int, itemsize: int, sublane: int,
                      target_bytes: int) -> int:
    # Prefer the full (lane-padded) row.  Only split columns when even a single
    # sublane-group of rows at full width would blow the per-block target.
    if flat_pad * itemsize * sublane <= target_bytes:
        return flat_pad
    c = (target_bytes // (itemsize * sublane)) // 128 * 128
    return max(128, int(c))


def _choose_row_block(batch: int, col_block: int, itemsize: int, sublane: int,
                      target_bytes: int, min_steps: int) -> int:
    # Always clamp to the VMEM target (no full-batch fallback), keep the row
    # tile a sublane multiple (or the full batch when it's small), and cap it so
    # the row axis gets at least `min_steps` grid steps for pipelining / TC sharding.
    rows_fit = max(sublane, target_bytes // (col_block * itemsize))
    rows_cap = max(1, -(-batch // min_steps))          # ceil(batch / min_steps)
    rb = min(batch, rows_fit, rows_cap)
    if rb >= batch:
        return batch                                   # tiny batch: single full-extent block
    rb = max(sublane, (rb // sublane) * sublane)       # sublane-aligned
    return min(int(rb), batch)


def pos_encoder(x: jnp.ndarray, pe_row: jnp.ndarray, *,
                target_bytes: int = 2 << 20, donate_x: bool = False) -> jnp.ndarray:
    """x: (B, D, L); pe_row: prepare_pos_encoding(pos_encoding, x.dtype). Returns x + PE."""
    B, d, L = x.shape
    flat = d * L
    flat_pad = _round_up(flat, 128)
    assert pe_row.shape == (1, flat_pad) and pe_row.dtype == x.dtype
    itemsize = x.dtype.itemsize
    sublane = _sublane(itemsize)

    # Flatten (D, L) -> D*L so the lane dim is large; pad to a multiple of 128
    # so every tile gets unmasked lane-dense stores.
    x2 = x.reshape(B, flat)
    if flat_pad != flat:
        x2 = jnp.pad(x2, ((0, 0), (0, flat_pad - flat)))

    # Guarantee enough grid steps on the row axis to overlap input DMA with
    # output writeback (and to give v7x's 2 TCs something to shard).
    total_bytes = B * flat_pad * itemsize
    if total_bytes >= (8 << 20):
        min_steps = 4
    elif total_bytes >= (1 << 20):
        min_steps = 2
    else:
        min_steps = 1

    col_block = _choose_col_block(flat_pad, itemsize, sublane, target_bytes)
    row_block = _choose_row_block(B, col_block, itemsize, sublane,
                                  target_bytes, min_steps)
    n_row = pl.cdiv(B, row_block)
    n_col = pl.cdiv(flat_pad, col_block)

    cost = pl.CostEstimate(
        flops=B * flat_pad,
        transcendentals=0,
        bytes_accessed=(2 * B + 1) * flat_pad * itemsize,  # read x + pe, write out
    )

    if n_col == 1:
        # Common case: full-row blocks, 1-D grid over the batch axis only.
        # PE block index is constant -> resident, never re-DMAed.
        grid = (n_row,)
        in_specs = [
            pl.BlockSpec((row_block, col_block), lambda i: (i, 0)),
            pl.BlockSpec((1, col_block), lambda i: (0, 0)),
        ]
        out_spec = pl.BlockSpec((row_block, col_block), lambda i: (i, 0))
        dims = ("parallel",)
    else:
        # Rare huge-row case: column axis OUTER so the PE block stays resident
        # across the inner batch sweep.
        grid = (n_col, n_row)
        in_specs = [
            pl.BlockSpec((row_block, col_block), lambda j, i: (i, j)),
            pl.BlockSpec((1, col_block), lambda j, i: (0, j)),
        ]
        out_spec = pl.BlockSpec((row_block, col_block), lambda j, i: (i, j))
        dims = ("parallel", "parallel")

    call_kwargs = {}
    if donate_x:
        call_kwargs["input_output_aliases"] = {0: 0}

    out = pl.pallas_call(
        _pos_add_kernel,
        out_shape=jax.ShapeDtypeStruct((B, flat_pad), x.dtype),
        grid=grid,
        in_specs=in_specs,
        out_specs=out_spec,
        compiler_params=pltpu.CompilerParams(dimension_semantics=dims),
        cost_estimate=cost,
        **call_kwargs,
    )(x2, pe_row)

    if flat_pad != flat:
        out = out[:, :flat]
    return out.reshape(B, d, L)


if __name__ == "__main__":
    key = jax.random.PRNGKey(0)

    # Small shapes consistent with the module: x (B, D, L) with D = 32.
    B, L = 2, 16
    x = jax.random.normal(key, (B, D, L), dtype=jnp.float32)
    pe = make_pos_encoding(D, L, dtype=jnp.float32)
    pe_row = prepare_pos_encoding(pe, x.dtype)          # prepared once, outside the hot path

    out = jax.block_until_ready(pos_encoder(x, pe_row))
    ref = x + pe[None, :, :]
    assert out.shape == (B, D, L)
    assert jnp.allclose(out, ref, atol=1e-6), "mismatch vs reference"

    # Also exercise the lane-padding path (D*L = 224 -> padded to 256) and a
    # batch that is not a power of two.
    L2 = 7
    x_b = jax.random.normal(jax.random.PRNGKey(0), (3, D, L2), dtype=jnp.float32)
    pe_b = make_pos_encoding(D, L2, dtype=jnp.float32)
    out_b = jax.block_until_ready(
        pos_encoder(x_b, prepare_pos_encoding(pe_b, x_b.dtype)))
    assert jnp.allclose(out_b, x_b + pe_b[None, :, :], atol=1e-6), "padded-path mismatch"

    print("KERNEL_OK")
</pallas_src>

<mosaic_0001>
module attributes {stable_mosaic.version = 11 : i64} {
  func.func @_pos_add_kernel(%arg0: i32, %arg1: memref<2x512xf32, #tpu.memory_space<vmem>>, %arg2: memref<1x512xf32, #tpu.memory_space<vmem>>, %arg3: memref<2x512xf32, #tpu.memory_space<vmem>>) attributes {dimension_semantics = [#tpu.dimension_semantics<parallel>], iteration_bounds = array<i64: 1>, scalar_prefetch = 0 : i64, scratch_operands = 0 : i64, tpu.core_type = #tpu.core_type<tc>, window_params = [{transform_indices = @transform_0, window_bounds = array<i64: 2, 512>}, {pipeline_mode = #tpu.pipeline_mode<synchronous>, transform_indices = @transform_1, window_bounds = array<i64: 1, 512>}, {transform_indices = @transform_2, window_bounds = array<i64: 2, 512>}]} {
    %c0 = arith.constant 0 : index
    %c0_0 = arith.constant 0 : index
    %0 = vector.load %arg1[%c0, %c0_0] : memref<2x512xf32, #tpu.memory_space<vmem>>, vector<2x512xf32>
    %c0_1 = arith.constant 0 : index
    %c0_2 = arith.constant 0 : index
    %1 = vector.load %arg2[%c0_1, %c0_2] : memref<1x512xf32, #tpu.memory_space<vmem>>, vector<1x512xf32>
    %2 = vector.broadcast %1 : vector<1x512xf32> to vector<2x512xf32>
    %3 = arith.addf %0, %2 : vector<2x512xf32>
    %c0_3 = arith.constant 0 : index
    %c0_4 = arith.constant 0 : index
    %4 = vector.load %arg3[%c0_3, %c0_4] : memref<2x512xf32, #tpu.memory_space<vmem>>, vector<2x512xf32>
    tpu.vector_store %arg3[%c0_3, %c0_4], %3 {strides = array<i32>} : memref<2x512xf32, #tpu.memory_space<vmem>>, vector<2x512xf32>,
    return
  }
  func.func @transform_0(%arg0: i32) -> (i32, i32) {
    %c0_i32 = arith.constant 0 : i32
    %c0_i32_0 = arith.constant 0 : i32
    return %arg0, %c0_i32 : i32, i32
  }
  func.func @transform_1(%arg0: i32) -> (i32, i32) {
    %c0_i32 = arith.constant 0 : i32
    %c0_i32_0 = arith.constant 0 : i32
    %c0_i32_1 = arith.constant 0 : i32
    return %c0_i32, %c0_i32_0 : i32, i32
  }
  func.func @transform_2(%arg0: i32) -> (i32, i32) {
    %c0_i32 = arith.constant 0 : i32
    %c0_i32_0 = arith.constant 0 : i32
    return %arg0, %c0_i32 : i32, i32
  }
}

</mosaic_0001>

<llo_original>
// kernel: tpu_custom_call.1
$region0: #{tpu_custom_call.1}
  #allocation0 [shape = 'u32[]', space=smem, size = 0x4, offset = 0x4, fixed_abs, tag = 'smem constant byte address 0x4 - core index']
  #allocation1 [shape = 'u32[144,128]{1,0:T(1,128)}', space=vmem, size = 0x12000, scoped, tag = 'internal scratch']
  %s0 = inlined_call_operand.hbm [shape: f32[2,512], index: 0, kind: input, shape index: {}]
  %s1 = inlined_call_operand.hbm [shape: f32[1,512], index: 1, kind: input, shape index: {}]
  %s2 = inlined_call_operand.hbm [shape: f32[2,512], index: 2, kind: output, shape index: {}]
  %s3 = sld [smem:[#allocation0]]
  $region26: #{tpu_custom_call.1} parent=0
    _
  %s5 = ssub.s32 1, %s3
  %s6 = scalar_select 0, %s5, %s3
  $region1: #{tpu_custom_call.1} parent=0
    #allocation2 [shape = 'u8[4096]{0}', space=vmem, size = 0x1000, scoped, tag = 'input window, operand 0, single buffered']
    #allocation3 [shape = 's32[1]{0}', space=sflag, size = 0x4, scoped, tag = 'scoped memory for tpu_custom_call.1']
    #allocation4 [shape = 's32[1]{0}', space=sflag, size = 0x4, scoped, tag = 'scoped memory for tpu_custom_call.1']
    #allocation5 [shape = 'u8[2048]{0}', space=vmem, size = 0x800, scoped, tag = 'input window, operand 1, single buffered']
    #allocation6 [shape = 's32[1]{0}', space=sflag, size = 0x4, scoped, tag = 'scoped memory for tpu_custom_call.1']
    #allocation7 [shape = 'u8[4096]{0}', space=vmem, size = 0x1000, scoped, tag = 'output window, operand 0, single buffered']
    %7 = vsyncpa [#allocation3], 0
    %8 = vsyncpa [#allocation6], 0
    %9 = vsyncpa [#allocation4], 0
    // Predicated region
    $region2: #{tpu_custom_call.1} parent=1 // pred_check
      _
    $region3: #{tpu_custom_call.1} parent=1 // pred_check_branch
      %11 = sbr.rel (0) target = $region5
    $region4: #{tpu_custom_call.1} parent=1 // pred_region
      %s13 = ssub.s32 128, 128
      %14 = vsyncadd [#allocation3], %s13
      %s16 = sshll.u32 [#allocation2], 4
      %s17 = int_to_ptr.vmem [resolvable:$true] %s16
      %19 = dma.hbm_to_vmem [thread:$0]  %s0, 128, %s17, [#allocation3]
    $region5: #{tpu_custom_call.1} parent=1 // pred_fallthru
      _
    // Predicated region
    $region6: #{tpu_custom_call.1} parent=1 // pred_check
      _
    $region7: #{tpu_custom_call.1} parent=1 // pred_check_branch
      %21 = sbr.rel (0) target = $region9
    $region8: #{tpu_custom_call.1} parent=1 // pred_region
      %s23 = ssub.s32 64, 64
      %24 = vsyncadd [#allocation6], %s23
      %s26 = sshll.u32 [#allocation5], 4
      %s27 = int_to_ptr.vmem [resolvable:$true] %s26
      %29 = dma.hbm_to_vmem [thread:$0]  %s1, 64, %s27, [#allocation6]
    $region9: #{tpu_custom_call.1} parent=1 // pred_fallthru
      _
    // Predicated region
    $region10: #{tpu_custom_call.1} parent=1 // pred_check
      _
    $region11: #{tpu_custom_call.1} parent=1 // pred_check_branch
      %31 = sbr.rel (0) target = $region13
    $region12: #{tpu_custom_call.1} parent=1 // pred_region
      %32 = dma.done [#allocation3], 128
    $region13: #{tpu_custom_call.1} parent=1 // pred_fallthru
      _
    // Predicated region
    $region14: #{tpu_custom_call.1} parent=1 // pred_check
      _
    $region15: #{tpu_custom_call.1} parent=1 // pred_check_branch
      %34 = sbr.rel (0) target = $region17
    $region16: #{tpu_custom_call.1} parent=1 // pred_region
      %35 = dma.done [#allocation6], 64
    $region17: #{tpu_custom_call.1} parent=1 // pred_fallthru
      _
    %v36 = vld [vmem:[#allocation2] sm:$0xff]
    %v37 = vld [vmem:[#allocation5] sm:$0xf]
    %v39 = vlaneseq
    %v40 = vshrl.u32 %v39, 7
    %v41 = vsub.s32 0, %v40
    %v42 = vrot.slane %v37, %v41
    %v43 = vlaneseq
    %v44 = vshrl.u32 %v43, 7
    %v45 = vsub.s32 1, %v44
    %v46 = vrot.slane %v37, %v45
    %v47 = vlaneseq
    %v48 = vshrl.u32 %v47, 7
    %v49 = vsub.s32 2, %v48
    %v50 = vrot.slane %v37, %v49
    %v51 = vlaneseq
    %v52 = vshrl.u32 %v51, 7
    %v53 = vsub.s32 3, %v52
    %v54 = vrot.slane %v37, %v53
    %v55 = vcombine.low %v42, %v46
    %v56 = vcombine.low %v50, %v54
    %v58 = vunpack.c.l.s4 1983009808
    %v59 = vunpack.c.0.s8 %v58
    %v60 = vlaneseq
    %v61 = vshrl.u32 %v60, 7
    %v62 = vsub.s32 %v59, %v61
    %v63 = vrot.slane %v55, %v62
    %v65 = vunpack.c.l.s4 1983009808
    %v66 = vunpack.c.0.s8 %v65
    %v67 = vlaneseq
    %v68 = vshrl.u32 %v67, 7
    %v69 = vsub.s32 %v66, %v68
    %v70 = vrot.slane %v56, %v69
    %v71 = vcombine.low %v63, %v70
    %v73 = vadd.f32 %v36, %v71
    %74 = vst [vmem:[#allocation7] sm:$0xff] %v73
    // Predicated region
    $region18: #{tpu_custom_call.1} parent=1 // pred_check
      _
    $region19: #{tpu_custom_call.1} parent=1 // pred_check_branch
      %76 = sbr.rel (0) target = $region21
    $region20: #{tpu_custom_call.1} parent=1 // pred_region
      %s78 = ssub.s32 128, 128
      %79 = vsyncadd [#allocation4], %s78
      %s81 = sshll.u32 [#allocation7], 4
      %s82 = int_to_ptr.vmem [resolvable:$true] %s81
      %84 = dma.vmem_to_hbm [thread:$0]  %s82, 128, %s2, [#allocation4]
    $region21: #{tpu_custom_call.1} parent=1 // pred_fallthru
      _
    // Predicated region
    $region22: #{tpu_custom_call.1} parent=1 // pred_check
      _
    $region23: #{tpu_custom_call.1} parent=1 // pred_check_branch
      %86 = sbr.rel (0) target = $region25
    $region24: #{tpu_custom_call.1} parent=1 // pred_region
      %87 = dma.done [#allocation4], 128
    $region25: #{tpu_custom_call.1} parent=1 // pred_fallthru
      _
    %88 = vsyncpa [#allocation3], 1
    %89 = vsyncpa [#allocation6], 1
    %90 = vsyncpa [#allocation4], 1

</llo_original>
